<compile_context>
chip_gen: v5e
topology: v5e:2x2
jax: 0.10.0
libtpu: 0.0.40
codegen_flags: <defaults>
</compile_context>

<pallas_src>
import jax
import jax.numpy as jnp
from jax import lax
from jax.experimental import pallas as pl
from jax.experimental.pallas import tpu as pltpu

IN_FEATURES = 88
HIDDEN = 128
NUM_ACTIONS = 5
OUT_LANES = 8  # [value, 5 probs, 2 pad] -> contiguous, small writeback


def actor_critic_kernel(x_ref, w1_ref, wh_ref, b_ref, out_ref):
    """affine1 -> ReLU -> fused [value | action logits] head -> masked softmax.

    x_ref:   (M, 88)    bf16 states (raw, no lane padding)
    w1_ref:  (88, 128)  bf16 affine1 weight
    wh_ref:  (128, 128) bf16 fused head weight: col 0 = value, cols 1..5 = actions, rest 0
    b_ref:   (2, 128)   f32: row 0 = affine1 bias, row 1 = fused head bias (same layout)
    out_ref: (M, 8)     f32: lane 0 = value, lanes 1..5 = softmax probs, lanes 6..7 = 0
    """
    b1 = b_ref[0:1, :]
    bh = b_ref[1:2, :]

    # Layer 1: bf16 MXU matmul with f32 accumulation, bias + ReLU in f32.
    h = jnp.maximum(
        jnp.dot(x_ref[...], w1_ref[...], preferred_element_type=jnp.float32) + b1, 0.0)
    # TODO(synk): nn.Dropout(p=0) is the identity in forward; elided.

    # Fused value/action head: one (M,128)@(128,128) MXU push.
    head = jnp.dot(h.astype(jnp.bfloat16), wh_ref[...],
                   preferred_element_type=jnp.float32) + bh          # (M, 128)
    head = head[:, 0:OUT_LANES]                                      # (M, 8) payload lanes

    # Masked, max-stabilized softmax over the 5 action lanes (lanes 1..5).
    lane = lax.broadcasted_iota(jnp.int32, head.shape, 1)
    is_logit = (lane >= 1) & (lane <= NUM_ACTIONS)
    masked = jnp.where(is_logit, head, -jnp.inf)
    m = jnp.max(masked, axis=1, keepdims=True)
    e = jnp.exp(jnp.where(is_logit, head - m, -jnp.inf))             # exp(-inf) == 0 exactly
    s = jnp.sum(e, axis=1, keepdims=True)
    probs = e / s                                                    # exact reciprocal

    # Lane 0 = value, lanes 1..5 = probs, lanes 6..7 = 0.
    out_ref[...] = jnp.where(lane == 0, head, probs)


def pack_params(w1, b1, wa, ba, wv, bv):
    """Host-side packing (done once): bf16 weights, fused head (col 0 = value, 1..5 = actions)."""
    w1_bf = w1.astype(jnp.bfloat16)                                   # (88, 128)
    wh = jnp.zeros((HIDDEN, HIDDEN), jnp.float32)
    wh = wh.at[:, 0:1].set(wv.astype(jnp.float32))
    wh = wh.at[:, 1:1 + NUM_ACTIONS].set(wa.astype(jnp.float32))
    wh_bf = wh.astype(jnp.bfloat16)                                   # (128, 128)
    bh = jnp.zeros((1, HIDDEN), jnp.float32)
    bh = bh.at[:, 0:1].set(bv.astype(jnp.float32))
    bh = bh.at[:, 1:1 + NUM_ACTIONS].set(ba.astype(jnp.float32))
    b_all = jnp.concatenate([b1.astype(jnp.float32), bh], axis=0)     # (2, 128) f32
    return w1_bf, wh_bf, b_all


def actor_critic_forward(state, w1_bf, wh_bf, b_all):
    """Single state (88,) -> (value (1,1), policy (1,5)). Matches the PyTorch forward."""
    x = jnp.asarray(state, jnp.float32).reshape(1, IN_FEATURES).astype(jnp.bfloat16)
    slab = pl.pallas_call(
        actor_critic_kernel,
        out_shape=jax.ShapeDtypeStruct((1, OUT_LANES), jnp.float32),
        # No grid / specs: whole-array VMEM blocks, no pipeline bookkeeping at M=1.
    )(x, w1_bf, wh_bf, b_all)
    return slab[:, 0:1], slab[:, 1:1 + NUM_ACTIONS]


def _round_up(v, m):
    return ((v + m - 1) // m) * m


def _pick_tile_m(batch, max_tile=512):
    """Rows per grid step: large enough to amortize ~0.35us/step overhead, capped at
    max_tile, never larger than the (rounded) batch, and kept such that the grid has
    >= 2 steps when possible (v7x has 2 TensorCores on the 'parallel' axis)."""
    b16 = _round_up(batch, 16)            # 16-row granularity (bf16 sublane packing)
    tile = min(b16, max_tile)
    if b16 > 16:
        tile = min(tile, _round_up(b16 // 2, 16))
    return tile


def actor_critic_forward_batched(states, w1_bf, wh_bf, b_all, max_tile=512):
    """Batched variant: states (B, 88) -> (value (B,1), policy (B,5)).

    Weights/bias stay resident in VMEM across grid steps (constant index_map); the batch
    axis is 'parallel' so v7x's two TensorCores split it.
    """
    B = states.shape[0]
    tile_m = _pick_tile_m(B, max_tile)
    bp = _round_up(B, tile_m)
    x = jnp.asarray(states, jnp.float32).astype(jnp.bfloat16)
    if bp != B:
        x = jnp.pad(x, ((0, bp - B), (0, 0)))                        # rows only; no lane pad
    slab = pl.pallas_call(
        actor_critic_kernel,
        out_shape=jax.ShapeDtypeStruct((bp, OUT_LANES), jnp.float32),
        grid=(bp // tile_m,),
        in_specs=[
            pl.BlockSpec((tile_m, IN_FEATURES), lambda i: (i, 0)),
            pl.BlockSpec((IN_FEATURES, HIDDEN), lambda i: (0, 0)),   # resident in VMEM
            pl.BlockSpec((HIDDEN, HIDDEN), lambda i: (0, 0)),        # resident in VMEM
            pl.BlockSpec((2, HIDDEN), lambda i: (0, 0)),             # resident in VMEM
        ],
        out_specs=pl.BlockSpec((tile_m, OUT_LANES), lambda i: (i, 0)),
        compiler_params=pltpu.CompilerParams(
            dimension_semantics=("parallel",)),
    )(x, w1_bf, wh_bf, b_all)
    return slab[:B, 0:1], slab[:B, 1:1 + NUM_ACTIONS]


def init_params(key):
    """Deterministic synthetic params matching nn.Linear shapes (stored as (in, out))."""
    k1, k2, k3, k4, k5, k6 = jax.random.split(key, 6)
    s1 = 1.0 / jnp.sqrt(IN_FEATURES)
    s2 = 1.0 / jnp.sqrt(HIDDEN)
    w1 = jax.random.uniform(k1, (IN_FEATURES, HIDDEN), jnp.float32, -s1, s1)
    b1 = jax.random.uniform(k2, (1, HIDDEN), jnp.float32, -s1, s1)
    wa = jax.random.uniform(k3, (HIDDEN, NUM_ACTIONS), jnp.float32, -s2, s2)
    ba = jax.random.uniform(k4, (1, NUM_ACTIONS), jnp.float32, -s2, s2)
    wv = jax.random.uniform(k5, (HIDDEN, 1), jnp.float32, -s2, s2)
    bv = jax.random.uniform(k6, (1, 1), jnp.float32, -s2, s2)
    return w1, b1, wa, ba, wv, bv


def _reference(x, w1, b1, wa, ba, wv, bv):
    """Pure-JAX reference mirroring the kernel's bf16 weight/activation quantization."""
    q = lambda a: a.astype(jnp.bfloat16).astype(jnp.float32)
    h = jnp.maximum(q(x) @ q(w1) + b1, 0.0)
    hq = q(h)
    value = hq @ q(wv) + bv
    policy = jax.nn.softmax(hq @ q(wa) + ba, axis=1)
    return value, policy


if __name__ == "__main__":
    key = jax.random.PRNGKey(0)
    pkey, xkey, bkey = jax.random.split(key, 3)
    w1, b1, wa, ba, wv, bv = init_params(pkey)
    w1_bf, wh_bf, b_all = pack_params(w1, b1, wa, ba, wv, bv)

    # --- single-state path (matches the PyTorch forward: one (88,) state vector) ---
    state = jax.random.normal(xkey, (IN_FEATURES,), jnp.float32)
    value, policy = actor_critic_forward(state, w1_bf, wh_bf, b_all)
    jax.block_until_ready((value, policy))

    v_ref, p_ref = _reference(state.reshape(1, IN_FEATURES), w1, b1, wa, ba, wv, bv)
    assert value.shape == (1, 1) and policy.shape == (1, NUM_ACTIONS)
    assert jnp.allclose(value, v_ref, atol=2e-3), "value mismatch"
    assert jnp.allclose(policy, p_ref, atol=2e-3), "policy mismatch"
    assert jnp.allclose(jnp.sum(policy, axis=1), 1.0, atol=1e-5), "policy not normalized"

    # --- batched path (amortizes dispatch / weight DMA across many states) ---
    B = 64
    states = jax.random.normal(bkey, (B, IN_FEATURES), jnp.float32)
    vb, pb = actor_critic_forward_batched(states, w1_bf, wh_bf, b_all)
    jax.block_until_ready((vb, pb))

    vb_ref, pb_ref = _reference(states, w1, b1, wa, ba, wv, bv)
    assert vb.shape == (B, 1) and pb.shape == (B, NUM_ACTIONS)
    assert jnp.allclose(vb, vb_ref, atol=2e-3), "batched value mismatch"
    assert jnp.allclose(pb, pb_ref, atol=2e-3), "batched policy mismatch"
    assert jnp.allclose(jnp.sum(pb, axis=1), 1.0, atol=1e-5), "batched policy not normalized"

    print("KERNEL_OK")
</pallas_src>

<mosaic_0001>
module attributes {stable_mosaic.version = 11 : i64} {
  func.func @actor_critic_kernel(%arg0: memref<1x88xbf16, #tpu.memory_space<vmem>>, %arg1: memref<88x128xbf16, #tpu.memory_space<vmem>>, %arg2: memref<128x128xbf16, #tpu.memory_space<vmem>>, %arg3: memref<2x128xf32, #tpu.memory_space<vmem>>, %arg4: memref<1x8xf32, #tpu.memory_space<vmem>>) attributes {dimension_semantics = [], scalar_prefetch = 0 : i64, scratch_operands = 0 : i64, tpu.core_type = #tpu.core_type<tc>} {
    %c0 = arith.constant 0 : index
    %c0_0 = arith.constant 0 : index
    %0 = vector.load %arg3[%c0, %c0_0] : memref<2x128xf32, #tpu.memory_space<vmem>>, vector<1x128xf32>
    %c1 = arith.constant 1 : index
    %c0_1 = arith.constant 0 : index
    %1 = vector.load %arg3[%c1, %c0_1] : memref<2x128xf32, #tpu.memory_space<vmem>>, vector<1x128xf32>
    %c0_2 = arith.constant 0 : index
    %c0_3 = arith.constant 0 : index
    %2 = vector.load %arg0[%c0_2, %c0_3] : memref<1x88xbf16, #tpu.memory_space<vmem>>, vector<1x88xbf16>
    %c0_4 = arith.constant 0 : index
    %c0_5 = arith.constant 0 : index
    %3 = vector.load %arg1[%c0_4, %c0_5] : memref<88x128xbf16, #tpu.memory_space<vmem>>, vector<88x128xbf16>
    %cst = arith.constant dense<0.000000e+00> : vector<1x128xf32>
    %4 = tpu.matmul %2, %3, %cst {dimension_numbers = #tpu.dot_dimension_numbers<[1], [0], [0], [1], [0, 0, 1, 1], [], []>} : vector<1x88xbf16>, vector<88x128xbf16>, vector<1x128xf32> -> vector<1x128xf32>
    %5 = arith.addf %4, %0 : vector<1x128xf32>
    %cst_6 = arith.constant 0.000000e+00 : f32
    %6 = vector.broadcast %cst_6 : f32 to vector<1x128xf32>
    %7 = arith.maximumf %5, %6 : vector<1x128xf32>
    %8 = arith.truncf %7 : vector<1x128xf32> to vector<1x128xbf16>
    %c0_7 = arith.constant 0 : index
    %c0_8 = arith.constant 0 : index
    %9 = vector.load %arg2[%c0_7, %c0_8] : memref<128x128xbf16, #tpu.memory_space<vmem>>, vector<128x128xbf16>
    %cst_9 = arith.constant dense<0.000000e+00> : vector<1x128xf32>
    %10 = tpu.matmul %8, %9, %cst_9 {dimension_numbers = #tpu.dot_dimension_numbers<[1], [0], [0], [1], [0, 0, 1, 1], [], []>} : vector<1x128xbf16>, vector<128x128xbf16>, vector<1x128xf32> -> vector<1x128xf32>
    %11 = arith.addf %10, %1 : vector<1x128xf32>
    %12 = vector.extract_strided_slice %11 {offsets = [0, 0], sizes = [1, 8], strides = [1, 1]} : vector<1x128xf32> to vector<1x8xf32>
    %13 = tpu.iota {dimensions = array<i32: 1>} : vector<1x8xi32>
    %c1_i32 = arith.constant 1 : i32
    %14 = vector.broadcast %c1_i32 : i32 to vector<1x8xi32>
    %15 = arith.cmpi sge, %13, %14 : vector<1x8xi32>
    %c5_i32 = arith.constant 5 : i32
    %16 = vector.broadcast %c5_i32 : i32 to vector<1x8xi32>
    %17 = arith.cmpi sle, %13, %16 : vector<1x8xi32>
    %18 = arith.andi %15, %17 : vector<1x8xi1>
    %cst_10 = arith.constant 0xFF800000 : f32
    %19 = vector.broadcast %cst_10 : f32 to vector<1x8xf32>
    %20 = arith.select %18, %12, %19 : vector<1x8xi1>, vector<1x8xf32>
    %cst_11 = arith.constant dense<0xFF800000> : vector<1xf32>
    %21 = vector.multi_reduction <maximumf>, %20, %cst_11 [1] : vector<1x8xf32> to vector<1xf32>
    %22 = vector.shape_cast %21 : vector<1xf32> to vector<1x1xf32>
    %23 = vector.broadcast %22 : vector<1x1xf32> to vector<1x8xf32>
    %24 = arith.subf %12, %23 : vector<1x8xf32>
    %cst_12 = arith.constant 0xFF800000 : f32
    %25 = vector.broadcast %cst_12 : f32 to vector<1x8xf32>
    %26 = arith.select %18, %24, %25 : vector<1x8xi1>, vector<1x8xf32>
    %27 = math.exp %26 : vector<1x8xf32>
    %cst_13 = arith.constant dense<0.000000e+00> : vector<1xf32>
    %28 = vector.multi_reduction <add>, %27, %cst_13 [1] : vector<1x8xf32> to vector<1xf32>
    %29 = vector.shape_cast %28 : vector<1xf32> to vector<1x1xf32>
    %30 = vector.broadcast %29 : vector<1x1xf32> to vector<1x8xf32>
    %31 = arith.divf %27, %30 : vector<1x8xf32>
    %c0_i32 = arith.constant 0 : i32
    %32 = vector.broadcast %c0_i32 : i32 to vector<1x8xi32>
    %33 = arith.cmpi eq, %13, %32 : vector<1x8xi32>
    %34 = arith.select %33, %12, %31 : vector<1x8xi1>, vector<1x8xf32>
    %c0_14 = arith.constant 0 : index
    %c0_15 = arith.constant 0 : index
    %35 = vector.load %arg4[%c0_14, %c0_15] : memref<1x8xf32, #tpu.memory_space<vmem>>, vector<1x8xf32>
    tpu.vector_store %arg4[%c0_14, %c0_15], %34 {strides = array<i32>} : memref<1x8xf32, #tpu.memory_space<vmem>>, vector<1x8xf32>,
    return
  }
}

</mosaic_0001>

<llo_original>
// kernel: tpu_custom_call.1
$region0: #{tpu_custom_call.1}
  #allocation0 [shape = 'u32[]', space=smem, size = 0x4, offset = 0x4, fixed_abs, tag = 'smem constant byte address 0x4 - core index']
  #allocation1 [shape = 'u32[72,128]{1,0:T(1,128)}', space=vmem, size = 0x9000, scoped, tag = 'internal scratch']
  %s0 = inlined_call_operand.hbm [shape: bf16[1,88], index: 0, kind: input, shape index: {}]
  %s1 = inlined_call_operand.hbm [shape: bf16[88,128], index: 1, kind: input, shape index: {}]
  %s2 = inlined_call_operand.hbm [shape: bf16[128,128], index: 2, kind: input, shape index: {}]
  %s3 = inlined_call_operand.vmem [shape: f32[2,128], index: 3, kind: input, shape index: {}]
  %s4 = inlined_call_operand.hbm [shape: f32[1,8], index: 4, kind: output, shape index: {}]
  %s5 = sld [smem:[#allocation0]]
  $region38: #{tpu_custom_call.1} parent=0
    _
  %s7 = ssub.s32 1, %s5
  %s8 = scalar_select 0, %s7, %s5
  $region1: #{tpu_custom_call.1} parent=0
    #allocation2 [shape = 'u8[512]{0}', space=vmem, size = 0x400, scoped, tag = 'input window, operand 0, single buffered']
    #allocation3 [shape = 's32[1]{0}', space=sflag, size = 0x4, scoped, tag = 'scoped memory for tpu_custom_call.1']
    #allocation4 [shape = 's32[1]{0}', space=sflag, size = 0x4, scoped, tag = 'scoped memory for tpu_custom_call.1']
    #allocation5 [shape = 'u8[22528]{0}', space=vmem, size = 0x5800, scoped, tag = 'input window, operand 1, single buffered']
    #allocation6 [shape = 's32[1]{0}', space=sflag, size = 0x4, scoped, tag = 'scoped memory for tpu_custom_call.1']
    #allocation7 [shape = 'u8[32768]{0}', space=vmem, size = 0x8000, scoped, tag = 'input window, operand 2, single buffered']
    #allocation8 [shape = 'u8[512]{0}', space=vmem, size = 0x400, scoped, tag = 'output window, operand 0, single buffered']
    %9 = vsyncpa [#allocation3], 0
    %10 = vsyncpa [#allocation6], 0
    %11 = vsyncpa [#allocation4], 0
    // Predicated region
    $region2: #{tpu_custom_call.1} parent=1 // pred_check
      _
    $region3: #{tpu_custom_call.1} parent=1 // pred_check_branch
      %13 = sbr.rel (0) target = $region5
    $region4: #{tpu_custom_call.1} parent=1 // pred_region
      %15 = vsyncadd [#allocation3], 0
      %s17 = sshll.u32 %s0, 4
      %s18 = int_to_ptr.hbm [resolvable:$true] %s17
      %s19 = sshll.u32 [#allocation2], 4
      %s20 = int_to_ptr.vmem [resolvable:$true] %s19
      %22 = dma.hbm_to_vmem [thread:$0]  %s18, 16, %s20, [#allocation3]
    $region5: #{tpu_custom_call.1} parent=1 // pred_fallthru
      _
    // Predicated region
    $region6: #{tpu_custom_call.1} parent=1 // pred_check
      _
    $region7: #{tpu_custom_call.1} parent=1 // pred_check_branch
      %24 = sbr.rel (0) target = $region9
    $region8: #{tpu_custom_call.1} parent=1 // pred_region
      %26 = vsyncadd [#allocation6], 0
      %s27 = sshll.u32 %s1, 4
      %s28 = int_to_ptr.hbm [resolvable:$true] %s27
      %s29 = sshll.u32 [#allocation5], 4
      %s30 = int_to_ptr.vmem [resolvable:$true] %s29
      %35 = dma.hbm_to_vmem [thread:$0]  %s28, 704, %s30, [#allocation6], 64, 64, 4
    $region9: #{tpu_custom_call.1} parent=1 // pred_fallthru
      _
    // Predicated region
    $region10: #{tpu_custom_call.1} parent=1 // pred_check
      _
    $region11: #{tpu_custom_call.1} parent=1 // pred_check_branch
      %37 = sbr.rel (0) target = $region13
    $region12: #{tpu_custom_call.1} parent=1 // pred_region
      %39 = vsyncadd [#allocation6], 0
      %s40 = sshll.u32 %s2, 4
      %s41 = int_to_ptr.hbm [resolvable:$true] %s40
      %s42 = sshll.u32 [#allocation7], 4
      %s43 = int_to_ptr.vmem [resolvable:$true] %s42
      %48 = dma.hbm_to_vmem [thread:$0]  %s41, 1024, %s43, [#allocation6], 64, 64, 4
    $region13: #{tpu_custom_call.1} parent=1 // pred_fallthru
      _
    // Predicated region
    $region14: #{tpu_custom_call.1} parent=1 // pred_check
      _
    $region15: #{tpu_custom_call.1} parent=1 // pred_check_branch
      %50 = sbr.rel (0) target = $region17
    $region16: #{tpu_custom_call.1} parent=1 // pred_region
      _
    $region17: #{tpu_custom_call.1} parent=1 // pred_fallthru
      _
    // Predicated region
    $region18: #{tpu_custom_call.1} parent=1 // pred_check
      _
    $region19: #{tpu_custom_call.1} parent=1 // pred_check_branch
      %52 = sbr.rel (0) target = $region21
    $region20: #{tpu_custom_call.1} parent=1 // pred_region
      %54 = dma.done [#allocation3], 16
    $region21: #{tpu_custom_call.1} parent=1 // pred_fallthru
      _
    // Predicated region
    $region22: #{tpu_custom_call.1} parent=1 // pred_check
      _
    $region23: #{tpu_custom_call.1} parent=1 // pred_check_branch
      %56 = sbr.rel (0) target = $region25
    $region24: #{tpu_custom_call.1} parent=1 // pred_region
      %58 = dma.done [#allocation6], 704
    $region25: #{tpu_custom_call.1} parent=1 // pred_fallthru
      _
    // Predicated region
    $region26: #{tpu_custom_call.1} parent=1 // pred_check
      _
    $region27: #{tpu_custom_call.1} parent=1 // pred_check_branch
      %60 = sbr.rel (0) target = $region29
    $region28: #{tpu_custom_call.1} parent=1 // pred_region
      %62 = dma.done [#allocation6], 1024
    $region29: #{tpu_custom_call.1} parent=1 // pred_fallthru
      _
    %v64 = vld [vmem:[%s3] sm:$0x1]
    %v65 = vld [vmem:[%s3 + $0x1] sm:$0x1]
    %v66 = vld [vmem:[#allocation2] sm:$0x1]
    %v67 = vld [vmem:[#allocation5] sm:$0xf]
    %v68 = vld [vmem:[#allocation5 + $0x4] sm:$0xf]
    %v69 = vld [vmem:[#allocation5 + $0x8] sm:$0xf]
    %v70 = vld [vmem:[#allocation5 + $0xc] sm:$0xf]
    %v71 = vld [vmem:[#allocation5 + $0x10] sm:$0xf]
    %v72 = vld [vmem:[#allocation5 + $0x14] sm:$0xf]
    %v73 = vld [vmem:[#allocation5 + $0x18] sm:$0xf]
    %v74 = vld [vmem:[#allocation5 + $0x1c] sm:$0xf]
    %v75 = vld [vmem:[#allocation5 + $0x20] sm:$0xf]
    %v76 = vld [vmem:[#allocation5 + $0x24] sm:$0xf]
    %v77 = vld [vmem:[#allocation5 + $0x28] sm:$0xf]
    %v89 = vunpack.c.l.b16 %v67
    %v90 = vunpack.c.l.b16 %v68
    %v91 = vunpack.c.l.b16 %v69
    %v92 = vunpack.c.l.b16 %v70
    %v93 = vunpack.c.l.b16 %v71
    %v94 = vunpack.c.l.b16 %v72
    %v95 = vunpack.c.l.b16 %v73
    %v96 = vunpack.c.l.b16 %v74
    %v97 = vunpack.c.l.b16 %v75
    %v98 = vunpack.c.l.b16 %v76
    %v99 = vunpack.c.l.b16 %v77
    %v100 = vpack.c.b16 %v90, %v89
    %v101 = vpack.c.b16 %v92, %v91
    %v102 = vpack.c.b16 %v94, %v93
    %v103 = vpack.c.b16 %v96, %v95
    %v104 = vpack.c.b16 %v98, %v97
    %v105 = vpack.c.b16 %v99, %v99
    %vm111 = vcmask 719872
    %v113 = vsel %vm111, %v66, 0
    %vm115 = vcmask 1043456
    %v117 = vsel %vm115, %v105, 0
    %119 = vmatpush.bf16.msra.mxu0 0
    %120 = vmatpush.bf16.msra.mxu0 0
    %121 = vmatpush.bf16.msra.mxu0 %v117
    %122 = vmatpush.bf16.msra.mxu0 %v104
    %123 = vmatpush.bf16.msra.mxu0 %v103
    %124 = vmatpush.bf16.msra.mxu0 %v102
    %125 = vmatpush.bf16.msra.mxu0 %v101
    %126 = vmatpush.bf16.msra.mxu0 %v100
    %127 = vmatmul.bf16.gmra.mxu0 %v113
    %v128 = vpop.f32.mrf.mxu0
    %v129 = vadd.f32 %v64, %v128
    %v130 = vpop.f32.mrf.mxu0
    %131 = vdwg.mxu0
    %v132 = vmax.f32 %v129, 0.0
    %v133 = vpack.c.bf16 %v132, %v132
    %v134 = vld [vmem:[#allocation7] sm:$0xf]
    %v135 = vld [vmem:[#allocation7 + $0x4] sm:$0xf]
    %v136 = vld [vmem:[#allocation7 + $0x8] sm:$0xf]
    %v137 = vld [vmem:[#allocation7 + $0xc] sm:$0xf]
    %v138 = vld [vmem:[#allocation7 + $0x10] sm:$0xf]
    %v139 = vld [vmem:[#allocation7 + $0x14] sm:$0xf]
    %v140 = vld [vmem:[#allocation7 + $0x18] sm:$0xf]
    %v141 = vld [vmem:[#allocation7 + $0x1c] sm:$0xf]
    %v142 = vld [vmem:[#allocation7 + $0x20] sm:$0xf]
    %v143 = vld [vmem:[#allocation7 + $0x24] sm:$0xf]
    %v144 = vld [vmem:[#allocation7 + $0x28] sm:$0xf]
    %v145 = vld [vmem:[#allocation7 + $0x2c] sm:$0xf]
    %v146 = vld [vmem:[#allocation7 + $0x30] sm:$0xf]
    %v147 = vld [vmem:[#allocation7 + $0x34] sm:$0xf]
    %v148 = vld [vmem:[#allocation7 + $0x38] sm:$0xf]
    %v149 = vld [vmem:[#allocation7 + $0x3c] sm:$0xf]
    %v166 = vunpack.c.l.b16 %v134
    %v167 = vunpack.c.l.b16 %v135
    %v168 = vunpack.c.l.b16 %v136
    %v169 = vunpack.c.l.b16 %v137
    %v170 = vunpack.c.l.b16 %v138
    %v171 = vunpack.c.l.b16 %v139
    %v172 = vunpack.c.l.b16 %v140
    %v173 = vunpack.c.l.b16 %v141
    %v174 = vunpack.c.l.b16 %v142
    %v175 = vunpack.c.l.b16 %v143
    %v176 = vunpack.c.l.b16 %v144
    %v177 = vunpack.c.l.b16 %v145
    %v178 = vunpack.c.l.b16 %v146
    %v179 = vunpack.c.l.b16 %v147
    %v180 = vunpack.c.l.b16 %v148
    %v181 = vunpack.c.l.b16 %v149
    %v182 = vpack.c.b16 %v167, %v166
    %v183 = vpack.c.b16 %v169, %v168
    %v184 = vpack.c.b16 %v171, %v170
    %v185 = vpack.c.b16 %v173, %v172
    %v186 = vpack.c.b16 %v175, %v174
    %v187 = vpack.c.b16 %v177, %v176
    %v188 = vpack.c.b16 %v179, %v178
    %v189 = vpack.c.b16 %v181, %v180
    %198 = vmatpush.bf16.msra.mxu0 %v189
    %199 = vmatpush.bf16.msra.mxu0 %v188
    %200 = vmatpush.bf16.msra.mxu0 %v187
    %201 = vmatpush.bf16.msra.mxu0 %v186
    %202 = vmatpush.bf16.msra.mxu0 %v185
    %203 = vmatpush.bf16.msra.mxu0 %v184
    %204 = vmatpush.bf16.msra.mxu0 %v183
    %205 = vmatpush.bf16.msra.mxu0 %v182
    %206 = vmatmul.bf16.gmra.mxu0 %v133
    %v207 = vpop.f32.mrf.mxu0
    %v208 = vadd.f32 %v65, %v207
    %v209 = vpop.f32.mrf.mxu0
    %210 = vdwg.mxu0
    %v211 = vlaneseq
    %v212 = vand.u32 %v211, 127
    %vm213 = vcmp.ge.s32.totalorder %v212, 1
    %vm214 = vcmp.le.s32.totalorder %v212, 5
    %vm215 = vmand %vm213, %vm214
    %v216 = vsel %vm215, %v208, -inf
    %vm217 = vcmask 57344
    %v218 = vsel %vm217, %v216, -inf
    %219 = vmax.xlane.f32.xlu0 %v218
    %v220 = vpop.xlane.xlu0 %219
    %v221 = vsub.f32 %v208, %v220
    %v222 = vsel %vm215, %v221, -inf
    %v223 = vmul.f32 %v222, 1.442695
    %v224 = vpow.pop %v223
    %v225 = vsel %vm217, %v224, 0.0
    %226 = vadd.xlane.f32.xlu0 %v225
    %v227 = vpop.xlane.xlu0 %226
    %v228 = vrcp.pop %v227
    %v229 = vmul.f32 %v227, %v228
    %v230 = vsub.f32 1.0, %v229
    %v231 = vmul.f32 %v228, %v230
    %v232 = vadd.f32 %v228, %v231
    %vm233 = vweird.f32 %v227
    %vm234 = vweird.f32 %v228
    %vm235 = vmor %vm233, %vm234
    %v236 = vsel %vm235, %v228, %v232
    %v237 = vand.u32 2147483647, %v227
    %vm238 = vcmp.eq.f32.partialorder %v237, 8.507059e+37
    %v239 = vand.u32 %v227, 2147483648
    %v240 = vor.u32 1.1754944e-38, %v239
    %v241 = vsel %vm238, %v240, %v236
    %v242 = vmul.f32 %v224, %v241
    %vm243 = vcmp.eq.s32.totalorder %v212, 0
    %v244 = vsel %vm243, %v208, %v242
    %245 = vst.msk [vmem:[#allocation8] sm:$0x1] %vm217, %v244
    // Predicated region
    $region30: #{tpu_custom_call.1} parent=1 // pred_check
      _
    $region31: #{tpu_custom_call.1} parent=1 // pred_check_branch
      %247 = sbr.rel (0) target = $region33
    $region32: #{tpu_custom_call.1} parent=1 // pred_region
      %249 = vsyncadd [#allocation4], 0
      %s251 = sshll.u32 [#allocation8], 4
      %s252 = int_to_ptr.vmem [resolvable:$true] %s251
      %s253 = sshll.u32 %s4, 4
      %s254 = int_to_ptr.hbm [resolvable:$true] %s253
      %256 = dma.vmem_to_hbm [thread:$0]  %s252, 16, %s254, [#allocation4]
    $region33: #{tpu_custom_call.1} parent=1 // pred_fallthru
      _
    // Predicated region
    $region34: #{tpu_custom_call.1} parent=1 // pred_check
      _
    $region35: #{tpu_custom_call.1} parent=1 // pred_check_branch
      %258 = sbr.rel (0) target = $region37
    $region36: #{tpu_custom_call.1} parent=1 // pred_region
      %260 = dma.done [#allocation4], 16
    $region37: #{tpu_custom_call.1} parent=1 // pred_fallthru
      _
    %261 = vsyncpa [#allocation3], 1
    %262 = vsyncpa [#allocation6], 1
    %263 = vsyncpa [#allocation4], 1

</llo_original>
